<compile_context>
chip_gen: v7x
topology: tpu7x:2x2x1
jax: 0.10.0
libtpu: 0.0.40
codegen_flags: <defaults>
</compile_context>

<pallas_src>
import functools

import jax
import jax.numpy as jnp
from jax.experimental import pallas as pl
from jax.experimental.pallas import tpu as pltpu


def _round_up(x, m):
    return ((x + m - 1) // m) * m


# --------------------------------------------------------------------------
# Kernel: one (batch tile, out-feature tile) of  relu(x @ W_t + b)
# --------------------------------------------------------------------------
def project_kernel(x_ref, w_ref, b_ref, o_ref):
    w = w_ref[...]                                   # (f_in_pad, tn), bf16
    x = x_ref[...].astype(w.dtype)                   # bf16 MXU operands
    h = jnp.dot(x, w, preferred_element_type=jnp.float32)   # f32 accumulation
    h = h + b_ref[...].astype(jnp.float32)           # (1, tn) broadcast, f32
    o_ref[...] = jnp.maximum(h, 0.0).astype(o_ref.dtype)    # fused ReLU


# --------------------------------------------------------------------------
# Tile selection under a VMEM budget
# --------------------------------------------------------------------------
def _choose_tiles(batch, f_in_pad, f_out_pad, w_itemsize, budget_bytes):
    # Lane-dense N tile; f_out_pad is a multiple of 128 so one of these divides.
    tn = 128
    for cand in (512, 256, 128):
        if f_out_pad % cand == 0:
            tn = cand
            break
    b_tile = min(_round_up(batch, 8), 512)

    def working_set(bt, tn_):
        # double-buffered x / w / bias / out tiles (x & out f32, w possibly bf16)
        return 2 * (bt * f_in_pad * 4
                    + f_in_pad * tn_ * w_itemsize
                    + tn_ * 4
                    + bt * tn_ * 4)

    while working_set(b_tile, tn) > budget_bytes and b_tile > 128:
        b_tile = max(_round_up(b_tile // 2, 8), 128)
    while working_set(b_tile, tn) > budget_bytes and tn > 128:
        tn //= 2
    return b_tile, tn, working_set(b_tile, tn)


# --------------------------------------------------------------------------
# Wrapper
# --------------------------------------------------------------------------
@functools.partial(jax.jit, static_argnames=("out_features",))
def project_forward(x, w_t, b, *, out_features):
    """x: (B, F_in) f32; w_t: (F_in_pad, F_out_pad) bf16/f32; b: (1, F_out_pad) f32."""
    B, f_in = x.shape
    f_in_pad, f_out_pad = w_t.shape

    vmem_budget = 40 << 20
    b_tile, tn, ws = _choose_tiles(B, f_in_pad, f_out_pad,
                                   w_t.dtype.itemsize, vmem_budget)

    b_pad = _round_up(B, b_tile)
    if b_pad != B or f_in_pad != f_in:
        # Only pad when shapes are ragged (skip the extra HBM round trip otherwise).
        x = jnp.pad(x, ((0, b_pad - B), (0, f_in_pad - f_in)))

    # N axis innermost: x's block index is constant across it -> stays resident.
    grid = (b_pad // b_tile, f_out_pad // tn)

    cost = pl.CostEstimate(
        flops=2 * b_pad * f_in_pad * f_out_pad,
        transcendentals=0,
        bytes_accessed=(b_pad * f_in_pad * 4
                        + f_in_pad * f_out_pad * w_t.dtype.itemsize
                        + f_out_pad * 4
                        + b_pad * f_out_pad * 4),
    )

    out = pl.pallas_call(
        project_kernel,
        out_shape=jax.ShapeDtypeStruct((b_pad, f_out_pad), x.dtype),
        grid=grid,
        in_specs=[
            # x: tiled over batch, constant across the N axis (resident).
            pl.BlockSpec((b_tile, f_in_pad), lambda i, j: (i, 0)),
            # weights: streamed over the N axis (bounded VMEM, pipelined DMA).
            pl.BlockSpec((f_in_pad, tn), lambda i, j: (0, j)),
            # bias: streamed with the same N index.
            pl.BlockSpec((1, tn), lambda i, j: (0, j)),
        ],
        out_specs=pl.BlockSpec((b_tile, tn), lambda i, j: (i, j)),
        compiler_params=pltpu.CompilerParams(
            dimension_semantics=("parallel", "parallel"),
            vmem_limit_bytes=int(min(max(2 * ws + (4 << 20), 32 << 20), 56 << 20)),
        ),
        cost_estimate=cost,
    )(x, w_t, b)

    if b_pad != B or f_out_pad != out_features:
        out = out[:B, :out_features]
    return out


# --------------------------------------------------------------------------
# PyTorch-style init (nn.Linear default: U(-1/sqrt(fan_in), 1/sqrt(fan_in)))
# --------------------------------------------------------------------------
def init_project_params(key, in_features, out_features, bias=True,
                        weight_dtype=jnp.bfloat16):
    kw, kb = jax.random.split(key)
    bound = 1.0 / (in_features ** 0.5)
    w = jax.random.uniform(kw, (out_features, in_features), jnp.float32,
                           -bound, bound)
    if bias:
        b = jax.random.uniform(kb, (out_features,), jnp.float32, -bound, bound)
    else:
        b = jnp.zeros((out_features,), jnp.float32)

    # Kernel-side parameters: pre-transposed, lane-dense (128-padded) out dim,
    # sublane-clean (16 for bf16 / 8 for f32) in dim, stored in weight_dtype.
    k_mult = 16 if jnp.dtype(weight_dtype).itemsize == 2 else 8
    f_in_pad = _round_up(in_features, k_mult)
    f_out_pad = _round_up(out_features, 128)

    w_t = jnp.zeros((f_in_pad, f_out_pad), jnp.float32)
    w_t = w_t.at[:in_features, :out_features].set(w.T).astype(weight_dtype)
    b_pad = jnp.zeros((1, f_out_pad), jnp.float32)
    b_pad = b_pad.at[0, :out_features].set(b)

    return dict(w=w, b=b, w_t=w_t, b_pad=b_pad)


def project_reference(x, params):
    """Pure-JAX f32 reference of  relu(x @ W.T + b)."""
    return jnp.maximum(x @ params["w"].T + params["b"][None, :], 0.0)


# --------------------------------------------------------------------------
# Demo / self-test
# --------------------------------------------------------------------------
if __name__ == "__main__":
    key = jax.random.PRNGKey(0)
    key, kx, kp = jax.random.split(key, 3)

    batch = 8
    in_features = 16
    out_features = 32
    use_bias = True

    x = jax.random.normal(kx, (batch, in_features), jnp.float32)
    params = init_project_params(kp, in_features, out_features, bias=use_bias)

    out = project_forward(x, params["w_t"], params["b_pad"],
                          out_features=out_features)
    out = jax.block_until_ready(out)

    ref = project_reference(x, params)
    assert out.shape == (batch, out_features)
    # bf16 weights + in-kernel bf16 cast of x -> compare against the f32
    # reference with a bf16-appropriate tolerance.
    assert jnp.allclose(out, ref, atol=3e-2, rtol=3e-2)

    print("KERNEL_OK")
</pallas_src>

<mosaic_0001>
module attributes {stable_mosaic.version = 11 : i64} {
  func.func @project_kernel(%arg0: i32, %arg1: i32, %arg2: memref<8x16xf32, #tpu.memory_space<vmem>>, %arg3: memref<16x128xbf16, #tpu.memory_space<vmem>>, %arg4: memref<1x128xf32, #tpu.memory_space<vmem>>, %arg5: memref<8x128xf32, #tpu.memory_space<vmem>>) attributes {dimension_semantics = [#tpu.dimension_semantics<parallel>, #tpu.dimension_semantics<parallel>], iteration_bounds = array<i64: 1, 1>, scalar_prefetch = 0 : i64, scratch_operands = 0 : i64, tpu.core_type = #tpu.core_type<tc>, window_params = [{transform_indices = @transform_0, window_bounds = array<i64: 8, 16>}, {transform_indices = @transform_1, window_bounds = array<i64: 16, 128>}, {transform_indices = @transform_2, window_bounds = array<i64: 1, 128>}, {transform_indices = @transform_3, window_bounds = array<i64: 8, 128>}]} {
    %c0 = arith.constant 0 : index
    %c0_0 = arith.constant 0 : index
    %0 = vector.load %arg3[%c0, %c0_0] : memref<16x128xbf16, #tpu.memory_space<vmem>>, vector<16x128xbf16>
    %c0_1 = arith.constant 0 : index
    %c0_2 = arith.constant 0 : index
    %1 = vector.load %arg2[%c0_1, %c0_2] : memref<8x16xf32, #tpu.memory_space<vmem>>, vector<8x16xf32>
    %2 = arith.truncf %1 : vector<8x16xf32> to vector<8x16xbf16>
    %cst = arith.constant dense<0.000000e+00> : vector<8x128xf32>
    %3 = tpu.matmul %2, %0, %cst {dimension_numbers = #tpu.dot_dimension_numbers<[1], [0], [0], [1], [0, 0, 1, 1], [], []>} : vector<8x16xbf16>, vector<16x128xbf16>, vector<8x128xf32> -> vector<8x128xf32>
    %c0_3 = arith.constant 0 : index
    %c0_4 = arith.constant 0 : index
    %4 = vector.load %arg4[%c0_3, %c0_4] : memref<1x128xf32, #tpu.memory_space<vmem>>, vector<1x128xf32>
    %5 = vector.broadcast %4 : vector<1x128xf32> to vector<8x128xf32>
    %6 = arith.addf %3, %5 : vector<8x128xf32>
    %cst_5 = arith.constant 0.000000e+00 : f32
    %7 = vector.broadcast %cst_5 : f32 to vector<8x128xf32>
    %8 = arith.maximumf %6, %7 : vector<8x128xf32>
    %c0_6 = arith.constant 0 : index
    %c0_7 = arith.constant 0 : index
    %9 = vector.load %arg5[%c0_6, %c0_7] : memref<8x128xf32, #tpu.memory_space<vmem>>, vector<8x128xf32>
    tpu.vector_store %arg5[%c0_6, %c0_7], %8 {strides = array<i32>} : memref<8x128xf32, #tpu.memory_space<vmem>>, vector<8x128xf32>,
    return
  }
  func.func @transform_0(%arg0: i32, %arg1: i32) -> (i32, i32) {
    %c0_i32 = arith.constant 0 : i32
    %c0_i32_0 = arith.constant 0 : i32
    return %arg0, %c0_i32 : i32, i32
  }
  func.func @transform_1(%arg0: i32, %arg1: i32) -> (i32, i32) {
    %c0_i32 = arith.constant 0 : i32
    %c0_i32_0 = arith.constant 0 : i32
    return %c0_i32, %arg1 : i32, i32
  }
  func.func @transform_2(%arg0: i32, %arg1: i32) -> (i32, i32) {
    %c0_i32 = arith.constant 0 : i32
    %c0_i32_0 = arith.constant 0 : i32
    return %c0_i32, %arg1 : i32, i32
  }
  func.func @transform_3(%arg0: i32, %arg1: i32) -> (i32, i32) {
    %c0_i32 = arith.constant 0 : i32
    return %arg0, %arg1 : i32, i32
  }
}

</mosaic_0001>

<llo_original>
// kernel: project_forward.1
$region0: #{project_forward.1}
  #allocation0 [shape = 'u32[]', space=smem, size = 0x4, offset = 0x4, fixed_abs, tag = 'smem constant byte address 0x4 - core index']
  #allocation1 [shape = 'u32[144,128]{1,0:T(1,128)}', space=vmem, size = 0x12000, scoped, tag = 'internal scratch']
  %s0 = inlined_call_operand.hbm [shape: f32[8,16], index: 0, kind: input, shape index: {}]
  %s1 = inlined_call_operand.hbm [shape: bf16[16,128], index: 1, kind: input, shape index: {}]
  %s2 = inlined_call_operand.vmem [shape: f32[1,128], index: 2, kind: input, shape index: {}]
  %s3 = inlined_call_operand.hbm [shape: f32[8,128], index: 3, kind: output, shape index: {}]
  %s4 = sld [smem:[#allocation0]]
  $region30: #{project_forward.1} parent=0
    _
  %s6 = ssub.s32 1, %s4
  %s7 = scalar_select 0, %s6, %s4
  $region1: #{project_forward.1} parent=0
    #allocation2 [shape = 'u8[4096]{0}', space=vmem, size = 0x1000, scoped, tag = 'input window, operand 0, single buffered']
    #allocation3 [shape = 's32[1]{0}', space=sflag, size = 0x4, scoped, tag = 'scoped memory for project_forward.1']
    #allocation4 [shape = 's32[1]{0}', space=sflag, size = 0x4, scoped, tag = 'scoped memory for project_forward.1']
    #allocation5 [shape = 'u8[4096]{0}', space=vmem, size = 0x1000, scoped, tag = 'input window, operand 1, single buffered']
    #allocation6 [shape = 's32[1]{0}', space=sflag, size = 0x4, scoped, tag = 'scoped memory for project_forward.1']
    #allocation7 [shape = 'u8[4096]{0}', space=vmem, size = 0x1000, scoped, tag = 'output window, operand 0, single buffered']
    %8 = vsyncpa [#allocation3], 0
    %9 = vsyncpa [#allocation6], 0
    %10 = vsyncpa [#allocation4], 0
    // Predicated region
    $region2: #{project_forward.1} parent=1 // pred_check
      _
    $region3: #{project_forward.1} parent=1 // pred_check_branch
      %12 = sbr.rel (0) target = $region5
    $region4: #{project_forward.1} parent=1 // pred_region
      %s14 = ssub.s32 128, 128
      %15 = vsyncadd [#allocation3], %s14
      %s17 = sshll.u32 [#allocation2], 4
      %s18 = int_to_ptr.vmem [resolvable:$true] %s17
      %20 = dma.hbm_to_vmem [thread:$0]  %s0, 128, %s18, [#allocation3]
    $region5: #{project_forward.1} parent=1 // pred_fallthru
      _
    // Predicated region
    $region6: #{project_forward.1} parent=1 // pred_check
      _
    $region7: #{project_forward.1} parent=1 // pred_check_branch
      %22 = sbr.rel (0) target = $region9
    $region8: #{project_forward.1} parent=1 // pred_region
      %s24 = ssub.s32 128, 128
      %25 = vsyncadd [#allocation6], %s24
      %s26 = sshll.u32 [#allocation5], 4
      %s27 = int_to_ptr.vmem [resolvable:$true] %s26
      %32 = dma.hbm_to_vmem [thread:$0]  %s1, 128, %s27, [#allocation6], 64, 64, 4
    $region9: #{project_forward.1} parent=1 // pred_fallthru
      _
    // Predicated region
    $region10: #{project_forward.1} parent=1 // pred_check
      _
    $region11: #{project_forward.1} parent=1 // pred_check_branch
      %34 = sbr.rel (0) target = $region13
    $region12: #{project_forward.1} parent=1 // pred_region
      _
    $region13: #{project_forward.1} parent=1 // pred_fallthru
      _
    // Predicated region
    $region14: #{project_forward.1} parent=1 // pred_check
      _
    $region15: #{project_forward.1} parent=1 // pred_check_branch
      %36 = sbr.rel (0) target = $region17
    $region16: #{project_forward.1} parent=1 // pred_region
      %37 = dma.done [#allocation3], 128
    $region17: #{project_forward.1} parent=1 // pred_fallthru
      _
    // Predicated region
    $region18: #{project_forward.1} parent=1 // pred_check
      _
    $region19: #{project_forward.1} parent=1 // pred_check_branch
      %39 = sbr.rel (0) target = $region21
    $region20: #{project_forward.1} parent=1 // pred_region
      %40 = dma.done [#allocation6], 128
    $region21: #{project_forward.1} parent=1 // pred_fallthru
      _
    %v42 = vld [vmem:[#allocation5] sm:$0xf]
    %v43 = vld [vmem:[#allocation5 + $0x4] sm:$0xf]
    %v44 = vld [vmem:[#allocation2] sm:$0xff]
    %v45 = vpack.c.bf16 %v44, %v44
    %v46 = vld [vmem:[%s2] sm:$0x1]
    %v48 = vlaneseq
    %v49 = vshrl.u32 %v48, 7
    %v50 = vsub.s32 0, %v49
    %v51 = vrot.slane %v46, %v50
    %v55 = vunpack.c.l.b16 %v42
    %v56 = vunpack.c.l.b16 %v43
    %v57 = vpack.c.b16 %v56, %v55
    %vm59 = vcmask 130048
    %v61 = vsel %vm59, %v45, 0
    %63 = vmatprep.subr.bf16.mxu0 0
    %64 = vmatpush1.bf16.msra.mxu0 %v57
    %65 = vmatprep.subr.bf16.mxu0 0
    %66 = vmatpush1.bf16.msra.mxu0 0
    %67 = vmatprep.subr.bf16.mxu0 0
    %68 = vmatpush1.bf16.msra.mxu0 0
    %69 = vmatprep.subr.bf16.mxu0 0
    %70 = vmatpush1.bf16.msra.mxu0 0
    %71 = vmatprep.subr.bf16.mxu0 0
    %72 = vmatpush1.bf16.msra.mxu0 0
    %73 = vmatprep.subr.bf16.mxu0 0
    %74 = vmatpush1.bf16.msra.mxu0 0
    %75 = vmatprep.subr.bf16.mxu0 0
    %76 = vmatpush1.bf16.msra.mxu0 0
    %77 = vmatprep.subr.bf16.mxu0 0
    %78 = vmatpush1.bf16.msra.mxu0 0
    %79 = vmatprep.subr.bf16.mxu0 0
    %80 = vmatpush1.bf16.msra.mxu0 0
    %81 = vmatprep.subr.bf16.mxu0 0
    %82 = vmatpush1.bf16.msra.mxu0 0
    %83 = vmatprep.subr.bf16.mxu0 0
    %84 = vmatpush1.bf16.msra.mxu0 0
    %85 = vmatprep.subr.bf16.mxu0 0
    %86 = vmatpush1.bf16.msra.mxu0 0
    %87 = vmatprep.subr.bf16.mxu0 0
    %88 = vmatpush1.bf16.msra.mxu0 0
    %89 = vmatprep.subr.bf16.mxu0 0
    %90 = vmatpush1.bf16.msra.mxu0 0
    %91 = vmatprep.subr.bf16.mxu0 0
    %92 = vmatpush1.bf16.msra.mxu0 0
    %93 = vmatprep.subr.bf16.mxu0 0
    %94 = vmatpush1.bf16.msra.mxu0 0
    %95 = vmatprep.mubr.bf16.mxu0 0
    %96 = vmatmul.mubr.bf16.gmra.mrb[0].mxu0 %v61
    %v97 = vpop.f32.mrb[0].mxu0
    %v98 = vadd.f32 %v51, %v97
    %v99 = vpop.f32.mrb[0].mxu0
    %v100 = vpop.f32.mrb[0].mxu0
    %v101 = vpop.f32.mrb[0].mxu0
    %102 = vdwg.mxu0
    %v103 = vmax.f32 %v98, 0.0
    %104 = vst [vmem:[#allocation7] sm:$0xff] %v103
    // Predicated region
    $region22: #{project_forward.1} parent=1 // pred_check
      _
    $region23: #{project_forward.1} parent=1 // pred_check_branch
      %106 = sbr.rel (0) target = $region25
    $region24: #{project_forward.1} parent=1 // pred_region
      %s108 = ssub.s32 128, 128
      %109 = vsyncadd [#allocation4], %s108
      %s111 = sshll.u32 [#allocation7], 4
      %s112 = int_to_ptr.vmem [resolvable:$true] %s111
      %114 = dma.vmem_to_hbm [thread:$0]  %s112, 128, %s3, [#allocation4]
    $region25: #{project_forward.1} parent=1 // pred_fallthru
      _
    // Predicated region
    $region26: #{project_forward.1} parent=1 // pred_check
      _
    $region27: #{project_forward.1} parent=1 // pred_check_branch
      %116 = sbr.rel (0) target = $region29
    $region28: #{project_forward.1} parent=1 // pred_region
      %117 = dma.done [#allocation4], 128
    $region29: #{project_forward.1} parent=1 // pred_fallthru
      _
    %118 = vsyncpa [#allocation3], 1
    %119 = vsyncpa [#allocation6], 1
    %120 = vsyncpa [#allocation4], 1

</llo_original>
